<compile_context>
chip_gen: v6e
topology: v6e:2x2x1
jax: 0.10.0
libtpu: 0.0.40
codegen_flags: <defaults>
</compile_context>

<pallas_src>
import functools

import jax
import jax.numpy as jnp
from jax import lax
from jax.experimental import pallas as pl
from jax.experimental.pallas import tpu as pltpu


def _rnn_chunk_kernel(emb_proj_ref,   # VMEM (TC, bs, Vp+H) f32 — streamed per chunk
                      h0_ref,         # VMEM (bs, H)        f32 — resident
                      wh_ref,         # VMEM (H, Vp+H)      param — resident
                      out_ref,        # VMEM (TC, bs, Vp)   f32 — streamed per chunk
                      hlast_ref,      # VMEM (bs, H)        f32 — resident output == carry
                      *, t_chunk, t_total, t_padded):
    c = pl.program_id(0)
    Vp = out_ref.shape[2]
    w_dtype = wh_ref.dtype

    # Initialize the hidden-state carry (resident output block) once.
    @pl.when(c == 0)
    def _():
        hlast_ref[...] = h0_ref[...]

    # Fully-unrolled static time loop over this chunk (t_chunk is small and
    # static, so all indexing is static and the LLO scheduler sees across
    # steps to overlap the per-step output store with the next matmul).
    for i in range(t_chunk):
        hidden = hlast_ref[...]                                    # (bs, H) f32

        # Single tiny recurrence matmul (K = H); the K = E part was hoisted.
        slab = emb_proj_ref[i] + jnp.dot(
            hidden.astype(w_dtype), wh_ref[...],
            preferred_element_type=jnp.float32)                    # (bs, Vp+H)

        logits = slab[:, :Vp]                                      # lane-aligned
        h_new = slab[:, Vp:]                                       # lane-aligned

        # Stable LogSoftmax(dim=1); padded vocab columns carry a -1e30 bias so
        # they never influence the max / logsumexp.
        m = jnp.max(logits, axis=1, keepdims=True)
        z = logits - m
        lse = jnp.log(jnp.sum(jnp.exp(z), axis=1, keepdims=True))
        out_ref[i] = z - lse

        if t_padded == t_total:
            hlast_ref[...] = h_new
        else:
            # Guard padded trailing time steps so they don't corrupt the carry.
            valid = (c * t_chunk + i) < t_total
            hlast_ref[...] = jnp.where(valid, h_new, hidden)


@functools.partial(jax.jit, static_argnames=("param_dtype", "t_chunk"))
def rnn_forward_seq(inputs_seq, hidden0, emb_table, w_i2h, b_i2h, w_i2o, b_i2o,
                    *, param_dtype=jnp.float32, t_chunk=8):
    """Run T RNN steps; recurrence fused in one Pallas kernel.

    inputs_seq : (T, bs) int32 token ids
    hidden0    : (bs, H) f32
    emb_table  : (V, E)  f32
    w_i2h      : (H, E+H) f32 (PyTorch Linear layout), b_i2h : (H,)
    w_i2o      : (V, E+H) f32 (PyTorch Linear layout), b_i2o : (V,)
    returns (log_probs (T, bs, V) f32, final_hidden (bs, H) f32)
    """
    T, bs = inputs_seq.shape
    V, E = emb_table.shape
    H = hidden0.shape[1]
    w_dtype = jnp.dtype(param_dtype)

    # Pad vocab up to a lane-tile multiple so slab[:, :Vp] / slab[:, Vp:] stay
    # lane-aligned and the (bs, Vp) output store is unmasked.  Padded logits
    # get a huge negative bias -> zero weight in the softmax.
    Vp = ((V + 127) // 128) * 128
    pad_v = Vp - V

    # Fused weights in kernel layout, lane axis = [Vp logits | H hidden]:
    #   cat(emb, hid) @ W^T  ==  emb @ We + hid @ Wh
    w_i2o_p = jnp.pad(w_i2o, ((0, pad_v), (0, 0)))
    b_i2o_p = jnp.pad(b_i2o, ((0, pad_v),), constant_values=-1e30)
    w_all = jnp.concatenate([w_i2o_p.T, w_i2h.T], axis=1)       # (E+H, Vp+H)
    we = w_all[:E].astype(jnp.float32)                          # (E, Vp+H)
    wh = w_all[E:].astype(w_dtype)                              # (H, Vp+H)
    b_all = jnp.concatenate([b_i2o_p, b_i2h]).reshape(1, Vp + H).astype(jnp.float32)

    # --- Hoisted, T-parallel work (plain XLA, outside the serial loop) ------
    # Embedding gather + the K=E input projection + bias, done once as a big
    # (T*bs, E) x (E, Vp+H) matmul with far better MXU fill than per-step M=bs.
    emb_all = emb_table[inputs_seq].astype(jnp.float32)         # (T, bs, E)
    emb_proj = jnp.dot(emb_all.reshape(T * bs, E), we,
                       preferred_element_type=jnp.float32)
    emb_proj = emb_proj.reshape(T, bs, Vp + H) + b_all          # (T, bs, Vp+H)

    # Chunk the time axis; pad up to a whole number of chunks (masked in-kernel).
    tc = max(1, min(int(t_chunk), T))
    n_chunks = pl.cdiv(T, tc)
    Tp = n_chunks * tc
    if Tp != T:
        emb_proj = jnp.pad(emb_proj, ((0, Tp - T), (0, 0), (0, 0)))

    grid_spec = pltpu.PrefetchScalarGridSpec(
        num_scalar_prefetch=0,
        grid=(n_chunks,),
        in_specs=[
            pl.BlockSpec((tc, bs, Vp + H), lambda c: (c, 0, 0)),  # streamed chunk
            pl.BlockSpec((bs, H), lambda c: (0, 0)),              # h0 (resident)
            pl.BlockSpec((H, Vp + H), lambda c: (0, 0)),          # Wh (resident)
        ],
        out_specs=(
            pl.BlockSpec((tc, bs, Vp), lambda c: (c, 0, 0)),      # per-chunk log-probs
            pl.BlockSpec((bs, H), lambda c: (0, 0)),              # final hidden / carry
        ),
        scratch_shapes=[],
    )

    wh_bytes = int(w_dtype.itemsize * H * (Vp + H))
    flops = int(Tp * (2 * bs * H * (Vp + H) + bs * (Vp + H) + 5 * bs * Vp))
    transcendentals = int(Tp * bs * (Vp + 1))
    bytes_accessed = int(4 * Tp * bs * (Vp + H)     # emb_proj stream in
                         + 4 * Tp * bs * Vp         # log-prob stream out
                         + wh_bytes                 # resident weight (once)
                         + 4 * bs * H * 2)          # hidden in/out

    out_pad, h_last = pl.pallas_call(
        functools.partial(_rnn_chunk_kernel, t_chunk=tc, t_total=T, t_padded=Tp),
        grid_spec=grid_spec,
        out_shape=(jax.ShapeDtypeStruct((Tp, bs, Vp), jnp.float32),
                   jax.ShapeDtypeStruct((bs, H), jnp.float32)),
        compiler_params=pltpu.CompilerParams(
            dimension_semantics=("arbitrary",),          # sequential hidden carry
            vmem_limit_bytes=32 * 1024 * 1024),
        cost_estimate=pl.CostEstimate(flops=flops,
                                      transcendentals=transcendentals,
                                      bytes_accessed=bytes_accessed),
    )(emb_proj, hidden0, wh)

    return out_pad[:T, :, :V], h_last


def rnn_forward(inputs, hidden, emb_table, w_i2h, b_i2h, w_i2o, b_i2o,
                *, param_dtype=jnp.float32):
    """Single-step equivalent of RNN.forward(inputs, hidden)."""
    out_seq, h_new = rnn_forward_seq(inputs[None, :], hidden, emb_table,
                                     w_i2h, b_i2h, w_i2o, b_i2o,
                                     param_dtype=param_dtype, t_chunk=1)
    return out_seq[0], h_new


# ------------------------- pure-JAX references ------------------------------
def _reference_step(inputs, hidden, emb_table, w_i2h, b_i2h, w_i2o, b_i2o):
    embedded = emb_table[inputs]                              # (bs, E)
    combined = jnp.concatenate([embedded, hidden], axis=1)    # (bs, E+H)
    h_new = combined @ w_i2h.T + b_i2h
    out = jax.nn.log_softmax(combined @ w_i2o.T + b_i2o, axis=1)
    return out, h_new


def _reference_seq(inputs_seq, hidden0, emb_table, w_i2h, b_i2h, w_i2o, b_i2o):
    def step(h, ids):
        out, h_new = _reference_step(ids, h, emb_table, w_i2h, b_i2h, w_i2o, b_i2o)
        return h_new, out
    h_last, outs = lax.scan(step, hidden0, inputs_seq)
    return outs, h_last


if __name__ == "__main__":
    # Small, TPU-friendly synthetic sizes consistent with the module's forward:
    # vocab V=256, embedding dim E=64, hidden H=32, batch bs=8, seq T=6.
    T, bs, V, E, H = 6, 8, 256, 64, 32

    key = jax.random.PRNGKey(0)
    k_emb, k_idx, k_hid, k_wih, k_bih, k_wio, k_bio = jax.random.split(key, 7)

    emb_table = jax.random.normal(k_emb, (V, E), dtype=jnp.float32)
    inputs_seq = jax.random.randint(k_idx, (T, bs), 0, V, dtype=jnp.int32)
    hidden0 = jax.random.normal(k_hid, (bs, H), dtype=jnp.float32)

    # PyTorch-layout Linear params (out_features, in_features).
    w_i2h = jax.random.normal(k_wih, (H, E + H), dtype=jnp.float32) * 0.1
    b_i2h = jax.random.normal(k_bih, (H,), dtype=jnp.float32) * 0.1
    w_i2o = jax.random.normal(k_wio, (V, E + H), dtype=jnp.float32) * 0.1
    b_i2o = jax.random.normal(k_bio, (V,), dtype=jnp.float32) * 0.1

    ref_out1, ref_h1 = _reference_step(inputs_seq[0], hidden0, emb_table,
                                       w_i2h, b_i2h, w_i2o, b_i2o)
    ref_seq, ref_h_last = _reference_seq(inputs_seq, hidden0, emb_table,
                                         w_i2h, b_i2h, w_i2o, b_i2o)

    # --- single step (matches RNN.forward exactly), f32 weights -------------
    out1, h1 = rnn_forward(inputs_seq[0], hidden0, emb_table,
                           w_i2h, b_i2h, w_i2o, b_i2o)
    jax.block_until_ready((out1, h1))
    assert out1.shape == (bs, V) and h1.shape == (bs, H)
    assert jnp.allclose(out1, ref_out1, atol=1e-4, rtol=1e-4)
    assert jnp.allclose(h1, ref_h1, atol=1e-4, rtol=1e-4)

    # --- fused T-step sequence, single chunk (T_CHUNK >= T), f32 weights ----
    out_seq, h_last = rnn_forward_seq(inputs_seq, hidden0, emb_table,
                                      w_i2h, b_i2h, w_i2o, b_i2o, t_chunk=8)
    jax.block_until_ready((out_seq, h_last))
    assert out_seq.shape == (T, bs, V) and h_last.shape == (bs, H)
    assert jnp.allclose(out_seq, ref_seq, atol=1e-4, rtol=1e-4)
    assert jnp.allclose(h_last, ref_h_last, atol=1e-4, rtol=1e-4)

    # --- fused T-step sequence, chunked time grid with padding (T=6, TC=4) --
    out_ck, h_ck = rnn_forward_seq(inputs_seq, hidden0, emb_table,
                                   w_i2h, b_i2h, w_i2o, b_i2o, t_chunk=4)
    jax.block_until_ready((out_ck, h_ck))
    assert jnp.allclose(out_ck, ref_seq, atol=1e-4, rtol=1e-4)
    assert jnp.allclose(h_ck, ref_h_last, atol=1e-4, rtol=1e-4)

    # --- bf16 recurrence weight (f32 accumulation) ---------------------------
    out_bf, h_bf = rnn_forward_seq(inputs_seq, hidden0, emb_table,
                                   w_i2h, b_i2h, w_i2o, b_i2o,
                                   param_dtype=jnp.bfloat16, t_chunk=8)
    jax.block_until_ready((out_bf, h_bf))
    assert jnp.allclose(out_bf, ref_seq, atol=1.5e-1, rtol=5e-2)
    assert jnp.allclose(h_bf, ref_h_last, atol=1.5e-1, rtol=5e-2)

    print("KERNEL_OK")
</pallas_src>

<mosaic_0001>
module attributes {stable_mosaic.version = 11 : i64} {
  func.func @_rnn_chunk_kernel(%arg0: i32, %arg1: memref<1x8x288xf32, #tpu.memory_space<vmem>>, %arg2: memref<8x32xf32, #tpu.memory_space<vmem>>, %arg3: memref<32x288xf32, #tpu.memory_space<vmem>>, %arg4: memref<1x8x256xf32, #tpu.memory_space<vmem>>, %arg5: memref<8x32xf32, #tpu.memory_space<vmem>>) attributes {dimension_semantics = [#tpu.dimension_semantics<arbitrary>], iteration_bounds = array<i64: 1>, scalar_prefetch = 0 : i64, scratch_operands = 0 : i64, tpu.core_type = #tpu.core_type<tc>, window_params = [{transform_indices = @transform_0, window_bounds = array<i64: 1, 8, 288>}, {pipeline_mode = #tpu.pipeline_mode<synchronous>, transform_indices = @transform_1, window_bounds = array<i64: 8, 32>}, {pipeline_mode = #tpu.pipeline_mode<synchronous>, transform_indices = @transform_2, window_bounds = array<i64: 32, 288>}, {transform_indices = @transform_3, window_bounds = array<i64: 1, 8, 256>}, {pipeline_mode = #tpu.pipeline_mode<synchronous>, transform_indices = @transform_4, window_bounds = array<i64: 8, 32>}]} {
    %c0_i32 = arith.constant 0 : i32
    %0 = arith.cmpi eq, %arg0, %c0_i32 : i32
    %1 = arith.extui %0 : i1 to i32
    %c0_i32_0 = arith.constant 0 : i32
    %2 = arith.cmpi ne, %1, %c0_i32_0 : i32
    scf.if %2 {
      %c0_14 = arith.constant 0 : index
      %c0_15 = arith.constant 0 : index
      %25 = vector.load %arg2[%c0_14, %c0_15] : memref<8x32xf32, #tpu.memory_space<vmem>>, vector<8x32xf32>
      %c0_16 = arith.constant 0 : index
      %c0_17 = arith.constant 0 : index
      %26 = vector.load %arg5[%c0_16, %c0_17] : memref<8x32xf32, #tpu.memory_space<vmem>>, vector<8x32xf32>
      tpu.vector_store %arg5[%c0_16, %c0_17], %25 {strides = array<i32>} : memref<8x32xf32, #tpu.memory_space<vmem>>, vector<8x32xf32>,
    } else {
    }
    %c0 = arith.constant 0 : index
    %c0_1 = arith.constant 0 : index
    %3 = vector.load %arg5[%c0, %c0_1] : memref<8x32xf32, #tpu.memory_space<vmem>>, vector<8x32xf32>
    %c0_2 = arith.constant 0 : index
    %c0_3 = arith.constant 0 : index
    %c0_4 = arith.constant 0 : index
    %4 = vector.load %arg1[%c0_2, %c0_3, %c0_4] : memref<1x8x288xf32, #tpu.memory_space<vmem>>, vector<1x8x288xf32>
    %5 = vector.shape_cast %4 : vector<1x8x288xf32> to vector<8x288xf32>
    %c0_5 = arith.constant 0 : index
    %c0_6 = arith.constant 0 : index
    %6 = vector.load %arg3[%c0_5, %c0_6] : memref<32x288xf32, #tpu.memory_space<vmem>>, vector<32x288xf32>
    %cst = arith.constant dense<0.000000e+00> : vector<8x288xf32>
    %7 = tpu.matmul %3, %6, %cst {dimension_numbers = #tpu.dot_dimension_numbers<[1], [0], [0], [1], [0, 0, 1, 1], [], []>} : vector<8x32xf32>, vector<32x288xf32>, vector<8x288xf32> -> vector<8x288xf32>
    %8 = arith.addf %5, %7 : vector<8x288xf32>
    %9 = vector.extract_strided_slice %8 {offsets = [0, 0], sizes = [8, 256], strides = [1, 1]} : vector<8x288xf32> to vector<8x256xf32>
    %10 = vector.extract_strided_slice %8 {offsets = [0, 256], sizes = [8, 32], strides = [1, 1]} : vector<8x288xf32> to vector<8x32xf32>
    %cst_7 = arith.constant dense<0xFF800000> : vector<8xf32>
    %11 = vector.multi_reduction <maximumf>, %9, %cst_7 [1] : vector<8x256xf32> to vector<8xf32>
    %12 = vector.shape_cast %11 : vector<8xf32> to vector<8x1xf32>
    %13 = vector.broadcast %12 : vector<8x1xf32> to vector<8x256xf32>
    %14 = arith.subf %9, %13 : vector<8x256xf32>
    %15 = math.exp %14 : vector<8x256xf32>
    %cst_8 = arith.constant dense<0.000000e+00> : vector<8xf32>
    %16 = vector.multi_reduction <add>, %15, %cst_8 [1] : vector<8x256xf32> to vector<8xf32>
    %17 = vector.shape_cast %16 : vector<8xf32> to vector<8x1xf32>
    %18 = math.log %17 : vector<8x1xf32>
    %19 = vector.broadcast %18 : vector<8x1xf32> to vector<8x256xf32>
    %20 = arith.subf %14, %19 : vector<8x256xf32>
    %c0_9 = arith.constant 0 : index
    %c0_10 = arith.constant 0 : index
    %c0_11 = arith.constant 0 : index
    %21 = vector.load %arg4[%c0_9, %c0_10, %c0_11] : memref<1x8x256xf32, #tpu.memory_space<vmem>>, vector<1x8x256xf32>
    %22 = vector.shape_cast %21 : vector<1x8x256xf32> to vector<8x256xf32>
    %23 = vector.shape_cast %20 : vector<8x256xf32> to vector<1x8x256xf32>
    tpu.vector_store %arg4[%c0_9, %c0_10, %c0_11], %23 {strides = array<i32>} : memref<1x8x256xf32, #tpu.memory_space<vmem>>, vector<1x8x256xf32>,
    %c0_12 = arith.constant 0 : index
    %c0_13 = arith.constant 0 : index
    %24 = vector.load %arg5[%c0_12, %c0_13] : memref<8x32xf32, #tpu.memory_space<vmem>>, vector<8x32xf32>
    tpu.vector_store %arg5[%c0_12, %c0_13], %10 {strides = array<i32>} : memref<8x32xf32, #tpu.memory_space<vmem>>, vector<8x32xf32>,
    return
  }
  func.func @transform_0(%arg0: i32) -> (i32, i32, i32) {
    %c0_i32 = arith.constant 0 : i32
    %c0_i32_0 = arith.constant 0 : i32
    %c0_i32_1 = arith.constant 0 : i32
    return %arg0, %c0_i32, %c0_i32_0 : i32, i32, i32
  }
  func.func @transform_1(%arg0: i32) -> (i32, i32) {
    %c0_i32 = arith.constant 0 : i32
    %c0_i32_0 = arith.constant 0 : i32
    %c0_i32_1 = arith.constant 0 : i32
    return %c0_i32, %c0_i32_0 : i32, i32
  }
  func.func @transform_2(%arg0: i32) -> (i32, i32) {
    %c0_i32 = arith.constant 0 : i32
    %c0_i32_0 = arith.constant 0 : i32
    %c0_i32_1 = arith.constant 0 : i32
    return %c0_i32, %c0_i32_0 : i32, i32
  }
  func.func @transform_3(%arg0: i32) -> (i32, i32, i32) {
    %c0_i32 = arith.constant 0 : i32
    %c0_i32_0 = arith.constant 0 : i32
    %c0_i32_1 = arith.constant 0 : i32
    return %arg0, %c0_i32, %c0_i32_0 : i32, i32, i32
  }
  func.func @transform_4(%arg0: i32) -> (i32, i32) {
    %c0_i32 = arith.constant 0 : i32
    %c0_i32_0 = arith.constant 0 : i32
    %c0_i32_1 = arith.constant 0 : i32
    return %c0_i32, %c0_i32_0 : i32, i32
  }
}

</mosaic_0001>

<llo_original>
// kernel: rnn_forward_seq.1
$region0: #{rnn_forward_seq.1}
  #allocation0 [shape = 'u32[]', space=smem, size = 0x4, offset = 0x4, fixed_abs, tag = 'smem constant byte address 0x4 - core index']
  #allocation1 [shape = 'u32[144,128]{1,0:T(1,128)}', space=vmem, size = 0x12000, scoped, tag = 'internal scratch']
  %s0 = inlined_call_operand.vmem [shape: f32[1,8,288], index: 0, kind: input, shape index: {}]
  %s1 = inlined_call_operand.vmem [shape: f32[8,32], index: 1, kind: input, shape index: {}]
  %s2 = inlined_call_operand.vmem [shape: f32[32,288], index: 2, kind: input, shape index: {}]
  %s3 = inlined_call_operand.hbm [shape: f32[1,8,256], index: 3, kind: output, shape index: {0}]
  %s4 = inlined_call_operand.hbm [shape: f32[8,32], index: 4, kind: output, shape index: {1}]
  %5 = xla_tuple %s3, %s4
  %s6 = sld [smem:[#allocation0]]
  $region34: #{rnn_forward_seq.1} parent=0
    _
  %s8 = ssub.s32 1, %s6
  %s9 = scalar_select 0, %s8, %s6
  $region1: #{rnn_forward_seq.1} parent=0
    #allocation2 [shape = 'u8[8192]{0}', space=vmem, size = 0x2000, scoped, tag = 'output window, operand 0, single buffered']
    #allocation3 [shape = 's32[1]{0}', space=sflag, size = 0x4, scoped, tag = 'scoped memory for rnn_forward_seq.1']
    #allocation4 [shape = 'u8[4096]{0}', space=vmem, size = 0x1000, scoped, tag = 'output window, operand 1, single buffered']
    #allocation5 [shape = 's32[1]{0}', space=sflag, size = 0x4, scoped, tag = 'scoped memory for rnn_forward_seq.1']
    %10 = vsyncpa [#allocation3], 0
    %11 = vsyncpa [#allocation5], 0
    // Predicated region
    $region2: #{rnn_forward_seq.1} parent=1 // pred_check
      _
    $region3: #{rnn_forward_seq.1} parent=1 // pred_check_branch
      %13 = sbr.rel (0) target = $region5
    $region4: #{rnn_forward_seq.1} parent=1 // pred_region
      _
    $region5: #{rnn_forward_seq.1} parent=1 // pred_fallthru
      _
    // Predicated region
    $region6: #{rnn_forward_seq.1} parent=1 // pred_check
      _
    $region7: #{rnn_forward_seq.1} parent=1 // pred_check_branch
      %15 = sbr.rel (0) target = $region9
    $region8: #{rnn_forward_seq.1} parent=1 // pred_region
      _
    $region9: #{rnn_forward_seq.1} parent=1 // pred_fallthru
      _
    // Predicated region
    $region10: #{rnn_forward_seq.1} parent=1 // pred_check
      _
    $region11: #{rnn_forward_seq.1} parent=1 // pred_check_branch
      %17 = sbr.rel (0) target = $region13
    $region12: #{rnn_forward_seq.1} parent=1 // pred_region
      _
    $region13: #{rnn_forward_seq.1} parent=1 // pred_fallthru
      _
    %p18 = scmp.eq.s32.totalorder 0, 0
    // Predicated region
    $region14: #{rnn_forward_seq.1} parent=1 // pred_check
      %p19 = pneg %p18
    $region15: #{rnn_forward_seq.1} parent=1 // pred_check_branch
      %21 = sbr.rel (%p19) target = $region17
    $region16: #{rnn_forward_seq.1} parent=1 // pred_region
      %v22 = vld [vmem:[%s1] sm:$0xff]
      %vm23 = vcmask 261120
      %24 = vst.msk [vmem:[#allocation4] sm:$0xff] %vm23, %v22
    $region17: #{rnn_forward_seq.1} parent=1 // pred_fallthru
      _
    %v25 = vld [vmem:[#allocation4] sm:$0xff]
    %v26 = vld [vmem:[%s0] sm:$0xff]
    %v27 = vld [vmem:[%s0 + $0x8] sm:$0xff]
    %v28 = vld [vmem:[%s0 + $0x10] sm:$0xff]
    %v29 = vld [vmem:[%s2] sm:$0xff]
    %v30 = vld [vmem:[%s2 + $0x8] sm:$0xff]
    %v31 = vld [vmem:[%s2 + $0x10] sm:$0xff]
    %v32 = vld [vmem:[%s2 + $0x18] sm:$0xff]
    %v33 = vld [vmem:[%s2 + $0x20] sm:$0xff]
    %v34 = vld [vmem:[%s2 + $0x28] sm:$0xff]
    %v35 = vld [vmem:[%s2 + $0x30] sm:$0xff]
    %v36 = vld [vmem:[%s2 + $0x38] sm:$0xff]
    %v37 = vld [vmem:[%s2 + $0x40] sm:$0xff]
    %v38 = vld [vmem:[%s2 + $0x48] sm:$0xff]
    %v39 = vld [vmem:[%s2 + $0x50] sm:$0xff]
    %v40 = vld [vmem:[%s2 + $0x58] sm:$0xff]
    %vm41 = vcmask 261120
    %v43 = vsel %vm41, %v25, 0
    %45 = vmatprep.subr.mxu0 0.0
    %46 = vmatpush1.msra.mxu0 0.0
    %47 = vmatprep.subr.mxu0 0.0
    %48 = vmatpush1.msra.mxu0 0.0
    %49 = vmatprep.subr.mxu0 0.0
    %50 = vmatpush1.msra.mxu0 0.0
    %51 = vmatprep.subr.mxu0 0.0
    %52 = vmatpush1.msra.mxu0 0.0
    %53 = vmatprep.subr.mxu0 0.0
    %54 = vmatpush1.msra.mxu0 0.0
    %55 = vmatprep.subr.mxu0 0.0
    %56 = vmatpush1.msra.mxu0 0.0
    %57 = vmatprep.subr.mxu0 0.0
    %58 = vmatpush1.msra.mxu0 0.0
    %59 = vmatprep.subr.mxu0 0.0
    %60 = vmatpush1.msra.mxu0 0.0
    %61 = vmatprep.subr.mxu0 0.0
    %62 = vmatpush1.msra.mxu0 0.0
    %63 = vmatprep.subr.mxu0 0.0
    %64 = vmatpush1.msra.mxu0 0.0
    %65 = vmatprep.subr.mxu0 0.0
    %66 = vmatpush1.msra.mxu0 0.0
    %67 = vmatprep.subr.mxu0 0.0
    %68 = vmatpush1.msra.mxu0 0.0
    %69 = vmatprep.subr.mxu0 %v39
    %70 = vmatpush1.msra.mxu0 %v38
    %71 = vmatprep.subr.mxu0 %v36
    %72 = vmatpush1.msra.mxu0 %v35
    %73 = vmatprep.subr.mxu0 %v33
    %74 = vmatpush1.msra.mxu0 %v32
    %75 = vmatprep.subr.mxu0 %v30
    %76 = vmatpush1.msra.mxu0 %v29
    %77 = vmatprep.subr.mxu0 0.0
    %78 = vmatpush2.msra.mxu0 0.0
    %79 = vmatprep.subr.mxu0 0.0
    %80 = vmatpush2.msra.mxu0 0.0
    %81 = vmatprep.subr.mxu0 0.0
    %82 = vmatpush2.msra.mxu0 0.0
    %83 = vmatprep.subr.mxu0 0.0
    %84 = vmatpush2.msra.mxu0 0.0
    %85 = vmatprep.subr.mxu0 0.0
    %86 = vmatpush2.msra.mxu0 0.0
    %87 = vmatprep.subr.mxu0 0.0
    %88 = vmatpush2.msra.mxu0 0.0
    %89 = vmatprep.subr.mxu0 0.0
    %90 = vmatpush2.msra.mxu0 0.0
    %91 = vmatprep.subr.mxu0 0.0
    %92 = vmatpush2.msra.mxu0 0.0
    %93 = vmatprep.subr.mxu0 0.0
    %94 = vmatpush2.msra.mxu0 0.0
    %95 = vmatprep.subr.mxu0 0.0
    %96 = vmatpush2.msra.mxu0 0.0
    %97 = vmatprep.subr.mxu0 0.0
    %98 = vmatpush2.msra.mxu0 0.0
    %99 = vmatprep.subr.mxu0 0.0
    %100 = vmatpush2.msra.mxu0 0.0
    %101 = vmatprep.subr.mxu0 0.0
    %102 = vmatpush2.msra.mxu0 0.0
    %103 = vmatprep.subr.mxu0 0.0
    %104 = vmatpush2.msra.mxu0 0.0
    %105 = vmatprep.subr.mxu0 0.0
    %106 = vmatpush2.msra.mxu0 0.0
    %107 = vmatprep.subr.mxu0 0.0
    %108 = vmatpush2.msra.mxu0 0.0
    %109 = vmatprep.mubr.f32.mxu0 0.0
    %110 = vmatmul.mubr.f32.gmra.mxu0 %v43
    %v111 = vpop.f32.mrf.mxu0
    %v112 = vadd.f32 0.0, %v111
    %v113 = vpop.f32.mrf.mxu0
    %v114 = vadd.f32 0.0, %v113
    %115 = vdwg.mxu0
    %116 = vmatprep.subr.mxu0 0.0
    %117 = vmatpush1.msra.mxu0 0.0
    %118 = vmatprep.subr.mxu0 0.0
    %119 = vmatpush1.msra.mxu0 0.0
    %120 = vmatprep.subr.mxu0 0.0
    %121 = vmatpush1.msra.mxu0 0.0
    %122 = vmatprep.subr.mxu0 0.0
    %123 = vmatpush1.msra.mxu0 0.0
    %124 = vmatprep.subr.mxu0 0.0
    %125 = vmatpush1.msra.mxu0 0.0
    %126 = vmatprep.subr.mxu0 0.0
    %127 = vmatpush1.msra.mxu0 0.0
    %128 = vmatprep.subr.mxu0 0.0
    %129 = vmatpush1.msra.mxu0 0.0
    %130 = vmatprep.subr.mxu0 0.0
    %131 = vmatpush1.msra.mxu0 0.0
    %132 = vmatprep.subr.mxu0 0.0
    %133 = vmatpush1.msra.mxu0 0.0
    %134 = vmatprep.subr.mxu0 0.0
    %135 = vmatpush1.msra.mxu0 0.0
    %136 = vmatprep.subr.mxu0 0.0
    %137 = vmatpush1.msra.mxu0 0.0
    %138 = vmatprep.subr.mxu0 0.0
    %139 = vmatpush1.msra.mxu0 0.0
    %140 = vmatprep.subr.mxu0 0.0
    %141 = vmatpush1.msra.mxu0 %v40
    %142 = vmatprep.subr.mxu0 0.0
    %143 = vmatpush1.msra.mxu0 %v37
    %144 = vmatprep.subr.mxu0 0.0
    %145 = vmatpush1.msra.mxu0 %v34
    %146 = vmatprep.subr.mxu0 0.0
    %147 = vmatpush1.msra.mxu0 %v31
    %148 = vmatprep.subr.mxu0 0.0
    %149 = vmatpush2.msra.mxu0 0.0
    %150 = vmatprep.subr.mxu0 0.0
    %151 = vmatpush2.msra.mxu0 0.0
    %152 = vmatprep.subr.mxu0 0.0
    %153 = vmatpush2.msra.mxu0 0.0
    %154 = vmatprep.subr.mxu0 0.0
    %155 = vmatpush2.msra.mxu0 0.0
    %156 = vmatprep.subr.mxu0 0.0
    %157 = vmatpush2.msra.mxu0 0.0
    %158 = vmatprep.subr.mxu0 0.0
    %159 = vmatpush2.msra.mxu0 0.0
    %160 = vmatprep.subr.mxu0 0.0
    %161 = vmatpush2.msra.mxu0 0.0
    %162 = vmatprep.subr.mxu0 0.0
    %163 = vmatpush2.msra.mxu0 0.0
    %164 = vmatprep.subr.mxu0 0.0
    %165 = vmatpush2.msra.mxu0 0.0
    %166 = vmatprep.subr.mxu0 0.0
    %167 = vmatpush2.msra.mxu0 0.0
    %168 = vmatprep.subr.mxu0 0.0
    %169 = vmatpush2.msra.mxu0 0.0
    %170 = vmatprep.subr.mxu0 0.0
    %171 = vmatpush2.msra.mxu0 0.0
    %172 = vmatprep.subr.mxu0 0.0
    %173 = vmatpush2.msra.mxu0 0.0
    %174 = vmatprep.subr.mxu0 0.0
    %175 = vmatpush2.msra.mxu0 0.0
    %176 = vmatprep.subr.mxu0 0.0
    %177 = vmatpush2.msra.mxu0 0.0
    %178 = vmatprep.subr.mxu0 0.0
    %179 = vmatpush2.msra.mxu0 0.0
    %180 = vmatprep.mubr.f32.mxu0 0.0
    %181 = vmatmul.mubr.f32.gmra.mxu0 %v43
    %v182 = vpop.f32.mrf.mxu0
    %v183 = vadd.f32 0.0, %v182
    %v184 = vpop.f32.mrf.mxu0
    %185 = vdwg.mxu0
    %v186 = vadd.f32 %v26, %v112
    %v187 = vadd.f32 %v27, %v114
    %v188 = vadd.f32 %v28, %v183
    %v189 = vmax.f32 %v186, %v187
    %190 = vmax.xlane.f32.xlu0 %v189
    %v191 = vpop.xlane.xlu0 %190
    %v192 = vsub.f32 %v186, %v191
    %v193 = vsub.f32 %v187, %v191
    %v194 = vmul.f32 %v192, 1.442695
    %v195 = vpow.pop %v194
    %v196 = vmul.f32 %v193, 1.442695
    %v197 = vpow.pop %v196
    %v198 = vadd.f32 %v195, %v197
    %199 = vadd.xlane.f32.xlu0 %v198
    %v200 = vpop.xlane.xlu0 %199
    %v201 = vlog2.pop %v200
    %v202 = vmul.f32 %v201, 0.6931472
    %v203 = vsub.f32 %v192, %v202
    %v204 = vsub.f32 %v193, %v202
    %205 = vst [vmem:[#allocation2] sm:$0xff] %v203
    %206 = vst [vmem:[#allocation2 + $0x8] sm:$0xff] %v204
    %207 = vst.msk [vmem:[#allocation4] sm:$0xff] %vm41, %v188
    // Predicated region
    $region18: #{rnn_forward_seq.1} parent=1 // pred_check
      _
    $region19: #{rnn_forward_seq.1} parent=1 // pred_check_branch
      %209 = sbr.rel (0) target = $region21
    $region20: #{rnn_forward_seq.1} parent=1 // pred_region
      %s211 = ssub.s32 256, 256
      %212 = vsyncadd [#allocation3], %s211
      %s214 = sshll.u32 [#allocation2], 4
      %s215 = int_to_ptr.vmem [resolvable:$true] %s214
      %217 = dma.vmem_to_hbm [thread:$0]  %s215, 256, %s3, [#allocation3]
    $region21: #{rnn_forward_seq.1} parent=1 // pred_fallthru
      _
    // Predicated region
    $region22: #{rnn_forward_seq.1} parent=1 // pred_check
      _
    $region23: #{rnn_forward_seq.1} parent=1 // pred_check_branch
      %219 = sbr.rel (0) target = $region25
    $region24: #{rnn_forward_seq.1} parent=1 // pred_region
      %s221 = ssub.s32 128, 128
      %222 = vsyncadd [#allocation5], %s221
      %s224 = sshll.u32 [#allocation4], 4
      %s225 = int_to_ptr.vmem [resolvable:$true] %s224
      %227 = dma.vmem_to_hbm [thread:$0]  %s225, 128, %s4, [#allocation5]
    $region25: #{rnn_forward_seq.1} parent=1 // pred_fallthru
      _
    // Predicated region
    $region26: #{rnn_forward_seq.1} parent=1 // pred_check
      _
    $region27: #{rnn_forward_seq.1} parent=1 // pred_check_branch
      %229 = sbr.rel (0) target = $region29
    $region28: #{rnn_forward_seq.1} parent=1 // pred_region
      %230 = dma.done [#allocation3], 256
    $region29: #{rnn_forward_seq.1} parent=1 // pred_fallthru
      _
    // Predicated region
    $region30: #{rnn_forward_seq.1} parent=1 // pred_check
      _
    $region31: #{rnn_forward_seq.1} parent=1 // pred_check_branch
      %232 = sbr.rel (0) target = $region33
    $region32: #{rnn_forward_seq.1} parent=1 // pred_region
      %233 = dma.done [#allocation5], 128
    $region33: #{rnn_forward_seq.1} parent=1 // pred_fallthru
      _
    %234 = vsyncpa [#allocation3], 1
    %235 = vsyncpa [#allocation5], 1

</llo_original>
